<compile_context>
chip_gen: v5e
topology: v5e:2x2
jax: 0.10.0
libtpu: 0.0.40
codegen_flags: <defaults>
</compile_context>

<pallas_src>
import functools

import numpy as np
import jax
import jax.numpy as jnp
from jax.experimental import pallas as pl
from jax.experimental.pallas import tpu as pltpu


# ---------------------------------------------------------------------------
# Fused ResBlock kernel (Bn batch elements per grid step)
# ---------------------------------------------------------------------------
def _make_resblock_kernel(H, W, Cin, C, Bn, P):
    """Build the kernel for fixed static shapes.

    x_ref  : (Bn*Cin, HW)      flat input block (row stride W, no padding)
    w1_ref : (C, 9*Cin)        3x3 conv weights, tap-major (k = dy*3 + dx)
    b1_ref : (C, 1)
    w2_ref : (Cin, C)          1x1 conv weights
    b2_ref : (Cin, 1)
    m_ref  : (2, HW)           column masks: row0 = (x >= 1), row1 = (x <= W-2)
    o_ref  : (Bn*Cin, HW)      final flat output block
    buf_ref: (Bn*Cin, HW+2P)   scratch: [zeros(P) | relu(x) | zeros(P)]
    t_ref  : (9*Cin, Bn*HW)    scratch: stacked shifted taps (matmul RHS)
    """
    HW = H * W
    R = Bn * Cin

    def kernel(x_ref, w1_ref, b1_ref, w2_ref, b2_ref, m_ref, o_ref,
               buf_ref, t_ref):
        f32 = jnp.float32

        # --- relu(x) into the zero-framed scratch (padding folded in-kernel).
        # relu is computed ONCE (hoisted out of the tap loop) and the zero
        # frame makes every out-of-image row read land on zeros.
        buf_ref[:, 0:P] = jnp.zeros((R, P), f32)
        buf_ref[:, P + HW:2 * P + HW] = jnp.zeros((R, P), f32)
        buf_ref[:, P:P + HW] = jnp.maximum(x_ref[...].astype(f32), 0.0)

        m_l = m_ref[0:1, :]          # valid when reading column x-1 (dx == 0)
        m_r = m_ref[1:2, :]          # valid when reading column x+1 (dx == 2)

        # --- stack the 9 shifted taps of every sample into t_ref -------------
        # Tap (dy, dx) for flat output position p = y*W + x reads
        # buf[P + (y+dy-1)*W + (x+dx-1)]; row overflow hits the zero frame,
        # column wrap-around is killed by the masks.
        for k in range(9):
            dy, dx = divmod(k, 3)
            off = P + (dy - 1) * W + (dx - 1)          # static lane offset
            for b in range(Bn):
                tap = buf_ref[b * Cin:(b + 1) * Cin, off:off + HW]
                if dx == 0:
                    tap = tap * m_l
                elif dx == 2:
                    tap = tap * m_r
                t_ref[k * Cin:(k + 1) * Cin, b * HW:(b + 1) * HW] = tap

        # --- conv3x3: ONE (C, 9*Cin) x (9*Cin, Bn*HW) MXU contraction --------
        acc = jnp.dot(w1_ref[...], t_ref[...],
                      preferred_element_type=jnp.float32)        # (C, Bn*HW)
        h = jnp.maximum(acc + b1_ref[...], 0.0)

        # --- conv1x1 + bias ----------------------------------------------------
        out = jnp.dot(w2_ref[...], h,
                      preferred_element_type=jnp.float32) + b2_ref[...]

        # --- residual (= relu(x): first ReLU is inplace in PyTorch) + store ----
        for b in range(Bn):
            res = buf_ref[b * Cin:(b + 1) * Cin, P:P + HW]
            o_ref[b * Cin:(b + 1) * Cin, :] = (
                out[:, b * HW:(b + 1) * HW] + res).astype(o_ref.dtype)

    return kernel


def _pick_block_n(n, cin, hw, itemsize=4, cap_bytes=4 << 20):
    """Smallest divisor of n whose x/out block fills >=8 dense sublanes and
    stays small in VMEM; falls back to the whole batch (full-dim block is
    always a legal BlockSpec)."""
    for d in range(1, n + 1):
        if (n % d == 0 and (d * cin) % 8 == 0
                and d * cin * hw * itemsize <= cap_bytes):
            return d
    return n


# ---------------------------------------------------------------------------
# Wrapper
# ---------------------------------------------------------------------------
@jax.jit
def resblock_pallas(x, w1, b1, w2, b2):
    """x: (N,Cin,H,W); w1: (C,Cin,3,3); b1: (C,); w2: (Cin,C,1,1); b2: (Cin,)."""
    n, cin, h, w = x.shape
    c = w1.shape[0]
    hw = h * w
    p = ((w + 1 + 127) // 128) * 128      # zero-frame width (lane aligned)
    bn = _pick_block_n(n, cin, hw)
    grid = (n // bn,)

    # Free, contiguous reshapes only — no pads / transposes / strips in XLA.
    x2d = x.reshape(n * cin, hw)
    w1s = jnp.transpose(w1, (0, 2, 3, 1)).reshape(c, 9 * cin)    # tap-major
    b1m = b1.reshape(c, 1)
    w2m = w2.reshape(cin, c)
    b2m = b2.reshape(cin, 1)

    # Column-validity masks (compile-time constants).
    col = np.arange(hw, dtype=np.int64) % w
    masks = jnp.asarray(
        np.stack([(col >= 1), (col <= w - 2)]).astype(np.float32))   # (2, hw)

    flops = 2 * n * hw * (9 * cin * c + cin * c)
    bytes_accessed = 4 * (2 * x.size + w1s.size + w2m.size + c + cin
                          + masks.size)

    out2d = pl.pallas_call(
        _make_resblock_kernel(h, w, cin, c, bn, p),
        out_shape=jax.ShapeDtypeStruct((n * cin, hw), x.dtype),
        grid=grid,
        in_specs=[
            pl.BlockSpec((bn * cin, hw), lambda i: (i, 0)),
            pl.BlockSpec((c, 9 * cin), lambda i: (0, 0)),
            pl.BlockSpec((c, 1), lambda i: (0, 0)),
            pl.BlockSpec((cin, c), lambda i: (0, 0)),
            pl.BlockSpec((cin, 1), lambda i: (0, 0)),
            pl.BlockSpec((2, hw), lambda i: (0, 0)),
        ],
        out_specs=pl.BlockSpec((bn * cin, hw), lambda i: (i, 0)),
        scratch_shapes=[
            pltpu.VMEM((bn * cin, hw + 2 * p), jnp.float32),   # padded relu(x)
            pltpu.VMEM((9 * cin, bn * hw), jnp.float32),       # stacked taps
        ],
        compiler_params=pltpu.CompilerParams(
            dimension_semantics=("parallel",),
            vmem_limit_bytes=32 * 1024 * 1024,
        ),
        cost_estimate=pl.CostEstimate(
            flops=flops, transcendentals=0, bytes_accessed=bytes_accessed),
    )(x2d, w1s, b1m, w2m, b2m, masks)

    return out2d.reshape(n, cin, h, w)    # free (contiguous) reshape


# ---------------------------------------------------------------------------
# Module wrapper (deterministic init, nn.Conv2d default scheme)
# ---------------------------------------------------------------------------
class ResBlockPallas:
    """Pallas port of ResBlock(in_channel, channel, SN=False)."""
    # TODO(synk): spectral_norm (SN=True) is a training-time weight
    # reparametrization with no kernel equivalent; only the default SN=False
    # path is implemented.

    def __init__(self, in_channel, channel=32, key=None):
        key = jax.random.PRNGKey(0) if key is None else key
        k1, k2, k3, k4 = jax.random.split(key, 4)
        bound1 = 1.0 / np.sqrt(in_channel * 3 * 3)
        self.w1 = jax.random.uniform(k1, (channel, in_channel, 3, 3),
                                     jnp.float32, -bound1, bound1)
        self.b1 = jax.random.uniform(k2, (channel,), jnp.float32,
                                     -bound1, bound1)
        bound2 = 1.0 / np.sqrt(channel * 1 * 1)
        self.w2 = jax.random.uniform(k3, (in_channel, channel, 1, 1),
                                     jnp.float32, -bound2, bound2)
        self.b2 = jax.random.uniform(k4, (in_channel,), jnp.float32,
                                     -bound2, bound2)

    def __call__(self, x):
        return resblock_pallas(x, self.w1, self.b1, self.w2, self.b2)


# ---------------------------------------------------------------------------
# Pure-JAX reference (literal port of the PyTorch forward)
# ---------------------------------------------------------------------------
def _resblock_ref(x, w1, b1, w2, b2):
    # The first nn.ReLU(inplace=True) inside self.conv mutates `input`, so the
    # trailing `out += input` adds relu(x), not x.
    xr = jnp.maximum(x, 0.0)
    h = jax.lax.conv_general_dilated(
        xr, w1, (1, 1), ((1, 1), (1, 1)),
        dimension_numbers=("NCHW", "OIHW", "NCHW")) + b1.reshape(1, -1, 1, 1)
    h = jnp.maximum(h, 0.0)
    out = jax.lax.conv_general_dilated(
        h, w2, (1, 1), ((0, 0), (0, 0)),
        dimension_numbers=("NCHW", "OIHW", "NCHW")) + b2.reshape(1, -1, 1, 1)
    return out + xr


if __name__ == "__main__":
    N, CIN, H, W = 2, 4, 16, 16
    CH = 32

    key = jax.random.PRNGKey(0)
    kx, kp = jax.random.split(key)
    x = jax.random.normal(kx, (N, CIN, H, W), jnp.float32)

    mod = ResBlockPallas(CIN, channel=CH, key=kp)
    out = mod(x)                       # (N, CIN, H, W)
    jax.block_until_ready(out)

    ref = _resblock_ref(x, mod.w1, mod.b1, mod.w2, mod.b2)
    assert out.shape == (N, CIN, H, W)
    np.testing.assert_allclose(np.asarray(out), np.asarray(ref),
                               rtol=1e-4, atol=1e-4)

    print("KERNEL_OK")
</pallas_src>

<mosaic_0001>
module attributes {stable_mosaic.version = 11 : i64} {
  func.func @kernel(%arg0: i32, %arg1: memref<8x256xf32, #tpu.memory_space<vmem>>, %arg2: memref<32x36xf32, #tpu.memory_space<vmem>>, %arg3: memref<32x1xf32, #tpu.memory_space<vmem>>, %arg4: memref<4x32xf32, #tpu.memory_space<vmem>>, %arg5: memref<4x1xf32, #tpu.memory_space<vmem>>, %arg6: memref<2x256xf32, #tpu.memory_space<vmem>>, %arg7: memref<8x256xf32, #tpu.memory_space<vmem>>, %arg8: memref<8x512xf32, #tpu.memory_space<vmem>>, %arg9: memref<36x512xf32, #tpu.memory_space<vmem>>) attributes {dimension_semantics = [#tpu.dimension_semantics<parallel>], iteration_bounds = array<i64: 1>, scalar_prefetch = 0 : i64, scratch_operands = 2 : i64, tpu.core_type = #tpu.core_type<tc>, window_params = [{transform_indices = @transform_0, window_bounds = array<i64: 8, 256>}, {pipeline_mode = #tpu.pipeline_mode<synchronous>, transform_indices = @transform_1, window_bounds = array<i64: 32, 36>}, {pipeline_mode = #tpu.pipeline_mode<synchronous>, transform_indices = @transform_2, window_bounds = array<i64: 32, 1>}, {pipeline_mode = #tpu.pipeline_mode<synchronous>, transform_indices = @transform_3, window_bounds = array<i64: 4, 32>}, {pipeline_mode = #tpu.pipeline_mode<synchronous>, transform_indices = @transform_4, window_bounds = array<i64: 4, 1>}, {pipeline_mode = #tpu.pipeline_mode<synchronous>, transform_indices = @transform_5, window_bounds = array<i64: 2, 256>}, {transform_indices = @transform_6, window_bounds = array<i64: 8, 256>}]} {
    %cst = arith.constant 0.000000e+00 : f32
    %0 = vector.broadcast %cst : f32 to vector<8x128xf32>
    %c0 = arith.constant 0 : index
    %c0_0 = arith.constant 0 : index
    %1 = vector.load %arg8[%c0, %c0_0] : memref<8x512xf32, #tpu.memory_space<vmem>>, vector<8x128xf32>
    tpu.vector_store %arg8[%c0, %c0_0], %0 {strides = array<i32>} : memref<8x512xf32, #tpu.memory_space<vmem>>, vector<8x128xf32>,
    %cst_1 = arith.constant 0.000000e+00 : f32
    %2 = vector.broadcast %cst_1 : f32 to vector<8x128xf32>
    %c0_2 = arith.constant 0 : index
    %c384 = arith.constant 384 : index
    %3 = vector.load %arg8[%c0_2, %c384] : memref<8x512xf32, #tpu.memory_space<vmem>>, vector<8x128xf32>
    tpu.vector_store %arg8[%c0_2, %c384], %2 {strides = array<i32>} : memref<8x512xf32, #tpu.memory_space<vmem>>, vector<8x128xf32>,
    %c0_3 = arith.constant 0 : index
    %c0_4 = arith.constant 0 : index
    %4 = vector.load %arg1[%c0_3, %c0_4] : memref<8x256xf32, #tpu.memory_space<vmem>>, vector<8x256xf32>
    %cst_5 = arith.constant 0.000000e+00 : f32
    %5 = vector.broadcast %cst_5 : f32 to vector<8x256xf32>
    %6 = arith.maximumf %4, %5 : vector<8x256xf32>
    %c0_6 = arith.constant 0 : index
    %c128 = arith.constant 128 : index
    %7 = vector.load %arg8[%c0_6, %c128] : memref<8x512xf32, #tpu.memory_space<vmem>>, vector<8x256xf32>
    tpu.vector_store %arg8[%c0_6, %c128], %6 {strides = array<i32>} : memref<8x512xf32, #tpu.memory_space<vmem>>, vector<8x256xf32>,
    %c0_7 = arith.constant 0 : index
    %c0_8 = arith.constant 0 : index
    %8 = vector.load %arg6[%c0_7, %c0_8] : memref<2x256xf32, #tpu.memory_space<vmem>>, vector<1x256xf32>
    %c1 = arith.constant 1 : index
    %c0_9 = arith.constant 0 : index
    %9 = vector.load %arg6[%c1, %c0_9] : memref<2x256xf32, #tpu.memory_space<vmem>>, vector<1x256xf32>
    %c0_10 = arith.constant 0 : index
    %c111 = arith.constant 111 : index
    %10 = vector.load %arg8[%c0_10, %c111] : memref<8x512xf32, #tpu.memory_space<vmem>>, vector<4x256xf32>
    %11 = vector.broadcast %8 : vector<1x256xf32> to vector<4x256xf32>
    %12 = arith.mulf %10, %11 : vector<4x256xf32>
    %c0_11 = arith.constant 0 : index
    %c0_12 = arith.constant 0 : index
    %13 = vector.load %arg9[%c0_11, %c0_12] : memref<36x512xf32, #tpu.memory_space<vmem>>, vector<4x256xf32>
    tpu.vector_store %arg9[%c0_11, %c0_12], %12 {strides = array<i32>} : memref<36x512xf32, #tpu.memory_space<vmem>>, vector<4x256xf32>,
    %c4 = arith.constant 4 : index
    %c111_13 = arith.constant 111 : index
    %14 = vector.load %arg8[%c4, %c111_13] : memref<8x512xf32, #tpu.memory_space<vmem>>, vector<4x256xf32>
    %15 = vector.broadcast %8 : vector<1x256xf32> to vector<4x256xf32>
    %16 = arith.mulf %14, %15 : vector<4x256xf32>
    %c0_14 = arith.constant 0 : index
    %c256 = arith.constant 256 : index
    %17 = vector.load %arg9[%c0_14, %c256] : memref<36x512xf32, #tpu.memory_space<vmem>>, vector<4x256xf32>
    tpu.vector_store %arg9[%c0_14, %c256], %16 {strides = array<i32>} : memref<36x512xf32, #tpu.memory_space<vmem>>, vector<4x256xf32>,
    %c0_15 = arith.constant 0 : index
    %c112 = arith.constant 112 : index
    %18 = vector.load %arg8[%c0_15, %c112] : memref<8x512xf32, #tpu.memory_space<vmem>>, vector<4x256xf32>
    %c4_16 = arith.constant 4 : index
    %c0_17 = arith.constant 0 : index
    %19 = vector.load %arg9[%c4_16, %c0_17] : memref<36x512xf32, #tpu.memory_space<vmem>>, vector<4x256xf32>
    tpu.vector_store %arg9[%c4_16, %c0_17], %18 {strides = array<i32>} : memref<36x512xf32, #tpu.memory_space<vmem>>, vector<4x256xf32>,
    %c4_18 = arith.constant 4 : index
    %c112_19 = arith.constant 112 : index
    %20 = vector.load %arg8[%c4_18, %c112_19] : memref<8x512xf32, #tpu.memory_space<vmem>>, vector<4x256xf32>
    %c4_20 = arith.constant 4 : index
    %c256_21 = arith.constant 256 : index
    %21 = vector.load %arg9[%c4_20, %c256_21] : memref<36x512xf32, #tpu.memory_space<vmem>>, vector<4x256xf32>
    tpu.vector_store %arg9[%c4_20, %c256_21], %20 {strides = array<i32>} : memref<36x512xf32, #tpu.memory_space<vmem>>, vector<4x256xf32>,
    %c0_22 = arith.constant 0 : index
    %c113 = arith.constant 113 : index
    %22 = vector.load %arg8[%c0_22, %c113] : memref<8x512xf32, #tpu.memory_space<vmem>>, vector<4x256xf32>
    %23 = vector.broadcast %9 : vector<1x256xf32> to vector<4x256xf32>
    %24 = arith.mulf %22, %23 : vector<4x256xf32>
    %c8 = arith.constant 8 : index
    %c0_23 = arith.constant 0 : index
    %25 = vector.load %arg9[%c8, %c0_23] : memref<36x512xf32, #tpu.memory_space<vmem>>, vector<4x256xf32>
    tpu.vector_store %arg9[%c8, %c0_23], %24 {strides = array<i32>} : memref<36x512xf32, #tpu.memory_space<vmem>>, vector<4x256xf32>,
    %c4_24 = arith.constant 4 : index
    %c113_25 = arith.constant 113 : index
    %26 = vector.load %arg8[%c4_24, %c113_25] : memref<8x512xf32, #tpu.memory_space<vmem>>, vector<4x256xf32>
    %27 = vector.broadcast %9 : vector<1x256xf32> to vector<4x256xf32>
    %28 = arith.mulf %26, %27 : vector<4x256xf32>
    %c8_26 = arith.constant 8 : index
    %c256_27 = arith.constant 256 : index
    %29 = vector.load %arg9[%c8_26, %c256_27] : memref<36x512xf32, #tpu.memory_space<vmem>>, vector<4x256xf32>
    tpu.vector_store %arg9[%c8_26, %c256_27], %28 {strides = array<i32>} : memref<36x512xf32, #tpu.memory_space<vmem>>, vector<4x256xf32>,
    %c0_28 = arith.constant 0 : index
    %c127 = arith.constant 127 : index
    %30 = vector.load %arg8[%c0_28, %c127] : memref<8x512xf32, #tpu.memory_space<vmem>>, vector<4x256xf32>
    %31 = vector.broadcast %8 : vector<1x256xf32> to vector<4x256xf32>
    %32 = arith.mulf %30, %31 : vector<4x256xf32>
    %c12 = arith.constant 12 : index
    %c0_29 = arith.constant 0 : index
    %33 = vector.load %arg9[%c12, %c0_29] : memref<36x512xf32, #tpu.memory_space<vmem>>, vector<4x256xf32>
    tpu.vector_store %arg9[%c12, %c0_29], %32 {strides = array<i32>} : memref<36x512xf32, #tpu.memory_space<vmem>>, vector<4x256xf32>,
    %c4_30 = arith.constant 4 : index
    %c127_31 = arith.constant 127 : index
    %34 = vector.load %arg8[%c4_30, %c127_31] : memref<8x512xf32, #tpu.memory_space<vmem>>, vector<4x256xf32>
    %35 = vector.broadcast %8 : vector<1x256xf32> to vector<4x256xf32>
    %36 = arith.mulf %34, %35 : vector<4x256xf32>
    %c12_32 = arith.constant 12 : index
    %c256_33 = arith.constant 256 : index
    %37 = vector.load %arg9[%c12_32, %c256_33] : memref<36x512xf32, #tpu.memory_space<vmem>>, vector<4x256xf32>
    tpu.vector_store %arg9[%c12_32, %c256_33], %36 {strides = array<i32>} : memref<36x512xf32, #tpu.memory_space<vmem>>, vector<4x256xf32>,
    %c0_34 = arith.constant 0 : index
    %c128_35 = arith.constant 128 : index
    %38 = vector.load %arg8[%c0_34, %c128_35] : memref<8x512xf32, #tpu.memory_space<vmem>>, vector<4x256xf32>
    %c16 = arith.constant 16 : index
    %c0_36 = arith.constant 0 : index
    %39 = vector.load %arg9[%c16, %c0_36] : memref<36x512xf32, #tpu.memory_space<vmem>>, vector<4x256xf32>
    tpu.vector_store %arg9[%c16, %c0_36], %38 {strides = array<i32>} : memref<36x512xf32, #tpu.memory_space<vmem>>, vector<4x256xf32>,
    %c4_37 = arith.constant 4 : index
    %c128_38 = arith.constant 128 : index
    %40 = vector.load %arg8[%c4_37, %c128_38] : memref<8x512xf32, #tpu.memory_space<vmem>>, vector<4x256xf32>
    %c16_39 = arith.constant 16 : index
    %c256_40 = arith.constant 256 : index
    %41 = vector.load %arg9[%c16_39, %c256_40] : memref<36x512xf32, #tpu.memory_space<vmem>>, vector<4x256xf32>
    tpu.vector_store %arg9[%c16_39, %c256_40], %40 {strides = array<i32>} : memref<36x512xf32, #tpu.memory_space<vmem>>, vector<4x256xf32>,
    %c0_41 = arith.constant 0 : index
    %c129 = arith.constant 129 : index
    %42 = vector.load %arg8[%c0_41, %c129] : memref<8x512xf32, #tpu.memory_space<vmem>>, vector<4x256xf32>
    %43 = vector.broadcast %9 : vector<1x256xf32> to vector<4x256xf32>
    %44 = arith.mulf %42, %43 : vector<4x256xf32>
    %c20 = arith.constant 20 : index
    %c0_42 = arith.constant 0 : index
    %45 = vector.load %arg9[%c20, %c0_42] : memref<36x512xf32, #tpu.memory_space<vmem>>, vector<4x256xf32>
    tpu.vector_store %arg9[%c20, %c0_42], %44 {strides = array<i32>} : memref<36x512xf32, #tpu.memory_space<vmem>>, vector<4x256xf32>,
    %c4_43 = arith.constant 4 : index
    %c129_44 = arith.constant 129 : index
    %46 = vector.load %arg8[%c4_43, %c129_44] : memref<8x512xf32, #tpu.memory_space<vmem>>, vector<4x256xf32>
    %47 = vector.broadcast %9 : vector<1x256xf32> to vector<4x256xf32>
    %48 = arith.mulf %46, %47 : vector<4x256xf32>
    %c20_45 = arith.constant 20 : index
    %c256_46 = arith.constant 256 : index
    %49 = vector.load %arg9[%c20_45, %c256_46] : memref<36x512xf32, #tpu.memory_space<vmem>>, vector<4x256xf32>
    tpu.vector_store %arg9[%c20_45, %c256_46], %48 {strides = array<i32>} : memref<36x512xf32, #tpu.memory_space<vmem>>, vector<4x256xf32>,
    %c0_47 = arith.constant 0 : index
    %c143 = arith.constant 143 : index
    %50 = vector.load %arg8[%c0_47, %c143] : memref<8x512xf32, #tpu.memory_space<vmem>>, vector<4x256xf32>
    %51 = vector.broadcast %8 : vector<1x256xf32> to vector<4x256xf32>
    %52 = arith.mulf %50, %51 : vector<4x256xf32>
    %c24 = arith.constant 24 : index
    %c0_48 = arith.constant 0 : index
    %53 = vector.load %arg9[%c24, %c0_48] : memref<36x512xf32, #tpu.memory_space<vmem>>, vector<4x256xf32>
    tpu.vector_store %arg9[%c24, %c0_48], %52 {strides = array<i32>} : memref<36x512xf32, #tpu.memory_space<vmem>>, vector<4x256xf32>,
    %c4_49 = arith.constant 4 : index
    %c143_50 = arith.constant 143 : index
    %54 = vector.load %arg8[%c4_49, %c143_50] : memref<8x512xf32, #tpu.memory_space<vmem>>, vector<4x256xf32>
    %55 = vector.broadcast %8 : vector<1x256xf32> to vector<4x256xf32>
    %56 = arith.mulf %54, %55 : vector<4x256xf32>
    %c24_51 = arith.constant 24 : index
    %c256_52 = arith.constant 256 : index
    %57 = vector.load %arg9[%c24_51, %c256_52] : memref<36x512xf32, #tpu.memory_space<vmem>>, vector<4x256xf32>
    tpu.vector_store %arg9[%c24_51, %c256_52], %56 {strides = array<i32>} : memref<36x512xf32, #tpu.memory_space<vmem>>, vector<4x256xf32>,
    %c0_53 = arith.constant 0 : index
    %c144 = arith.constant 144 : index
    %58 = vector.load %arg8[%c0_53, %c144] : memref<8x512xf32, #tpu.memory_space<vmem>>, vector<4x256xf32>
    %c28 = arith.constant 28 : index
    %c0_54 = arith.constant 0 : index
    %59 = vector.load %arg9[%c28, %c0_54] : memref<36x512xf32, #tpu.memory_space<vmem>>, vector<4x256xf32>
    tpu.vector_store %arg9[%c28, %c0_54], %58 {strides = array<i32>} : memref<36x512xf32, #tpu.memory_space<vmem>>, vector<4x256xf32>,
    %c4_55 = arith.constant 4 : index
    %c144_56 = arith.constant 144 : index
    %60 = vector.load %arg8[%c4_55, %c144_56] : memref<8x512xf32, #tpu.memory_space<vmem>>, vector<4x256xf32>
    %c28_57 = arith.constant 28 : index
    %c256_58 = arith.constant 256 : index
    %61 = vector.load %arg9[%c28_57, %c256_58] : memref<36x512xf32, #tpu.memory_space<vmem>>, vector<4x256xf32>
    tpu.vector_store %arg9[%c28_57, %c256_58], %60 {strides = array<i32>} : memref<36x512xf32, #tpu.memory_space<vmem>>, vector<4x256xf32>,
    %c0_59 = arith.constant 0 : index
    %c145 = arith.constant 145 : index
    %62 = vector.load %arg8[%c0_59, %c145] : memref<8x512xf32, #tpu.memory_space<vmem>>, vector<4x256xf32>
    %63 = vector.broadcast %9 : vector<1x256xf32> to vector<4x256xf32>
    %64 = arith.mulf %62, %63 : vector<4x256xf32>
    %c32 = arith.constant 32 : index
    %c0_60 = arith.constant 0 : index
    %65 = vector.load %arg9[%c32, %c0_60] : memref<36x512xf32, #tpu.memory_space<vmem>>, vector<4x256xf32>
    tpu.vector_store %arg9[%c32, %c0_60], %64 {strides = array<i32>} : memref<36x512xf32, #tpu.memory_space<vmem>>, vector<4x256xf32>,
    %c4_61 = arith.constant 4 : index
    %c145_62 = arith.constant 145 : index
    %66 = vector.load %arg8[%c4_61, %c145_62] : memref<8x512xf32, #tpu.memory_space<vmem>>, vector<4x256xf32>
    %67 = vector.broadcast %9 : vector<1x256xf32> to vector<4x256xf32>
    %68 = arith.mulf %66, %67 : vector<4x256xf32>
    %c32_63 = arith.constant 32 : index
    %c256_64 = arith.constant 256 : index
    %69 = vector.load %arg9[%c32_63, %c256_64] : memref<36x512xf32, #tpu.memory_space<vmem>>, vector<4x256xf32>
    tpu.vector_store %arg9[%c32_63, %c256_64], %68 {strides = array<i32>} : memref<36x512xf32, #tpu.memory_space<vmem>>, vector<4x256xf32>,
    %c0_65 = arith.constant 0 : index
    %c0_66 = arith.constant 0 : index
    %70 = vector.load %arg2[%c0_65, %c0_66] : memref<32x36xf32, #tpu.memory_space<vmem>>, vector<32x36xf32>
    %c0_67 = arith.constant 0 : index
    %c0_68 = arith.constant 0 : index
    %71 = vector.load %arg9[%c0_67, %c0_68] : memref<36x512xf32, #tpu.memory_space<vmem>>, vector<36x512xf32>
    %cst_69 = arith.constant dense<0.000000e+00> : vector<32x512xf32>
    %72 = tpu.matmul %70, %71, %cst_69 {dimension_numbers = #tpu.dot_dimension_numbers<[1], [0], [0], [1], [0, 0, 1, 1], [], []>} : vector<32x36xf32>, vector<36x512xf32>, vector<32x512xf32> -> vector<32x512xf32>
    %c0_70 = arith.constant 0 : index
    %c0_71 = arith.constant 0 : index
    %73 = vector.load %arg3[%c0_70, %c0_71] : memref<32x1xf32, #tpu.memory_space<vmem>>, vector<32x1xf32>
    %74 = vector.broadcast %73 : vector<32x1xf32> to vector<32x512xf32>
    %75 = arith.addf %72, %74 : vector<32x512xf32>
    %cst_72 = arith.constant 0.000000e+00 : f32
    %76 = vector.broadcast %cst_72 : f32 to vector<32x512xf32>
    %77 = arith.maximumf %75, %76 : vector<32x512xf32>
    %c0_73 = arith.constant 0 : index
    %c0_74 = arith.constant 0 : index
    %78 = vector.load %arg4[%c0_73, %c0_74] : memref<4x32xf32, #tpu.memory_space<vmem>>, vector<4x32xf32>
    %cst_75 = arith.constant dense<0.000000e+00> : vector<4x512xf32>
    %79 = tpu.matmul %78, %77, %cst_75 {dimension_numbers = #tpu.dot_dimension_numbers<[1], [0], [0], [1], [0, 0, 1, 1], [], []>} : vector<4x32xf32>, vector<32x512xf32>, vector<4x512xf32> -> vector<4x512xf32>
    %c0_76 = arith.constant 0 : index
    %c0_77 = arith.constant 0 : index
    %80 = vector.load %arg5[%c0_76, %c0_77] : memref<4x1xf32, #tpu.memory_space<vmem>>, vector<4x1xf32>
    %81 = vector.broadcast %80 : vector<4x1xf32> to vector<4x512xf32>
    %82 = arith.addf %79, %81 : vector<4x512xf32>
    %c0_78 = arith.constant 0 : index
    %c128_79 = arith.constant 128 : index
    %83 = vector.load %arg8[%c0_78, %c128_79] : memref<8x512xf32, #tpu.memory_space<vmem>>, vector<4x256xf32>
    %84 = vector.extract_strided_slice %82 {offsets = [0, 0], sizes = [4, 256], strides = [1, 1]} : vector<4x512xf32> to vector<4x256xf32>
    %85 = arith.addf %84, %83 : vector<4x256xf32>
    %c0_80 = arith.constant 0 : index
    %c0_81 = arith.constant 0 : index
    %86 = vector.load %arg7[%c0_80, %c0_81] : memref<8x256xf32, #tpu.memory_space<vmem>>, vector<4x256xf32>
    tpu.vector_store %arg7[%c0_80, %c0_81], %85 {strides = array<i32>} : memref<8x256xf32, #tpu.memory_space<vmem>>, vector<4x256xf32>,
    %c4_82 = arith.constant 4 : index
    %c128_83 = arith.constant 128 : index
    %87 = vector.load %arg8[%c4_82, %c128_83] : memref<8x512xf32, #tpu.memory_space<vmem>>, vector<4x256xf32>
    %88 = vector.extract_strided_slice %82 {offsets = [0, 256], sizes = [4, 256], strides = [1, 1]} : vector<4x512xf32> to vector<4x256xf32>
    %89 = arith.addf %88, %87 : vector<4x256xf32>
    %c4_84 = arith.constant 4 : index
    %c0_85 = arith.constant 0 : index
    %90 = vector.load %arg7[%c4_84, %c0_85] : memref<8x256xf32, #tpu.memory_space<vmem>>, vector<4x256xf32>
    tpu.vector_store %arg7[%c4_84, %c0_85], %89 {strides = array<i32>} : memref<8x256xf32, #tpu.memory_space<vmem>>, vector<4x256xf32>,
    return
  }
  func.func @transform_0(%arg0: i32) -> (i32, i32) {
    %c0_i32 = arith.constant 0 : i32
    %c0_i32_0 = arith.constant 0 : i32
    return %arg0, %c0_i32 : i32, i32
  }
  func.func @transform_1(%arg0: i32) -> (i32, i32) {
    %c0_i32 = arith.constant 0 : i32
    %c0_i32_0 = arith.constant 0 : i32
    %c0_i32_1 = arith.constant 0 : i32
    return %c0_i32, %c0_i32_0 : i32, i32
  }
  func.func @transform_2(%arg0: i32) -> (i32, i32) {
    %c0_i32 = arith.constant 0 : i32
    %c0_i32_0 = arith.constant 0 : i32
    %c0_i32_1 = arith.constant 0 : i32
    return %c0_i32, %c0_i32_0 : i32, i32
  }
  func.func @transform_3(%arg0: i32) -> (i32, i32) {
    %c0_i32 = arith.constant 0 : i32
    %c0_i32_0 = arith.constant 0 : i32
    %c0_i32_1 = arith.constant 0 : i32
    return %c0_i32, %c0_i32_0 : i32, i32
  }
  func.func @transform_4(%arg0: i32) -> (i32, i32) {
    %c0_i32 = arith.constant 0 : i32
    %c0_i32_0 = arith.constant 0 : i32
    %c0_i32_1 = arith.constant 0 : i32
    return %c0_i32, %c0_i32_0 : i32, i32
  }
  func.func @transform_5(%arg0: i32) -> (i32, i32) {
    %c0_i32 = arith.constant 0 : i32
    %c0_i32_0 = arith.constant 0 : i32
    %c0_i32_1 = arith.constant 0 : i32
    return %c0_i32, %c0_i32_0 : i32, i32
  }
  func.func @transform_6(%arg0: i32) -> (i32, i32) {
    %c0_i32 = arith.constant 0 : i32
    %c0_i32_0 = arith.constant 0 : i32
    return %arg0, %c0_i32 : i32, i32
  }
}

</mosaic_0001>

<llo_original>
// kernel: resblock_pallas.1
$region0: #{resblock_pallas.1}
  #allocation0 [shape = 'u32[]', space=smem, size = 0x4, offset = 0x4, fixed_abs, tag = 'smem constant byte address 0x4 - core index']
  #allocation1 [shape = 'u32[72,128]{1,0:T(1,128)}', space=vmem, size = 0x9000, scoped, tag = 'internal scratch']
  #allocation2 [shape = 'f32[8,512]{1,0:T(8,128)}', space=vmem, size = 0x4000, scoped, tag = 'scratch operand']
  #allocation3 [shape = 'f32[36,512]{1,0:T(8,128)}', space=vmem, size = 0x14000, scoped, tag = 'scratch operand']
  %s0 = inlined_call_operand.vmem [shape: f32[8,256], index: 0, kind: input, shape index: {}]
  %s1 = inlined_call_operand.vmem [shape: f32[32,36], index: 1, kind: input, shape index: {}]
  %s2 = inlined_call_operand.vmem [shape: f32[32,1], index: 2, kind: input, shape index: {}]
  %s3 = inlined_call_operand.vmem [shape: f32[4,32], index: 3, kind: input, shape index: {}]
  %s4 = inlined_call_operand.vmem [shape: f32[4,1], index: 4, kind: input, shape index: {}]
  %s5 = inlined_call_operand.vmem [shape: f32[2,256], index: 5, kind: input, shape index: {}]
  %s6 = inlined_call_operand.vmem [shape: f32[8,256], index: 6, kind: output, shape index: {}]
  %s7 = sld [smem:[#allocation0]]
  $region34: #{resblock_pallas.1} parent=0
    _
  %s9 = ssub.s32 1, %s7
  %s10 = scalar_select 0, %s9, %s7
  // Predicated region
  $region2: #{resblock_pallas.1} parent=0 // pred_check
    _
  $region3: #{resblock_pallas.1} parent=0 // pred_check_branch
    %12 = sbr.rel (0) target = $region5
  $region4: #{resblock_pallas.1} parent=0 // pred_region
    _
  $region5: #{resblock_pallas.1} parent=0 // pred_fallthru
    _
  // Predicated region
  $region6: #{resblock_pallas.1} parent=0 // pred_check
    _
  $region7: #{resblock_pallas.1} parent=0 // pred_check_branch
    %14 = sbr.rel (0) target = $region9
  $region8: #{resblock_pallas.1} parent=0 // pred_region
    _
  $region9: #{resblock_pallas.1} parent=0 // pred_fallthru
    _
  // Predicated region
  $region10: #{resblock_pallas.1} parent=0 // pred_check
    _
  $region11: #{resblock_pallas.1} parent=0 // pred_check_branch
    %16 = sbr.rel (0) target = $region13
  $region12: #{resblock_pallas.1} parent=0 // pred_region
    _
  $region13: #{resblock_pallas.1} parent=0 // pred_fallthru
    _
  // Predicated region
  $region14: #{resblock_pallas.1} parent=0 // pred_check
    _
  $region15: #{resblock_pallas.1} parent=0 // pred_check_branch
    %18 = sbr.rel (0) target = $region17
  $region16: #{resblock_pallas.1} parent=0 // pred_region
    _
  $region17: #{resblock_pallas.1} parent=0 // pred_fallthru
    _
  // Predicated region
  $region18: #{resblock_pallas.1} parent=0 // pred_check
    _
  $region19: #{resblock_pallas.1} parent=0 // pred_check_branch
    %20 = sbr.rel (0) target = $region21
  $region20: #{resblock_pallas.1} parent=0 // pred_region
    _
  $region21: #{resblock_pallas.1} parent=0 // pred_fallthru
    _
  // Predicated region
  $region22: #{resblock_pallas.1} parent=0 // pred_check
    _
  $region23: #{resblock_pallas.1} parent=0 // pred_check_branch
    %22 = sbr.rel (0) target = $region25
  $region24: #{resblock_pallas.1} parent=0 // pred_region
    _
  $region25: #{resblock_pallas.1} parent=0 // pred_fallthru
    _
  %23 = vst [vmem:[#allocation2] sm:$0xff] 0.0
  %24 = vst [vmem:[#allocation2 + $0x18] sm:$0xff] 0.0
  %v25 = vld [vmem:[%s0] sm:$0xff]
  %v26 = vld [vmem:[%s0 + $0x8] sm:$0xff]
  %v27 = vmax.f32 %v25, 0.0
  %v28 = vmax.f32 %v26, 0.0
  %29 = vst [vmem:[#allocation2 + $0x8] sm:$0xff] %v27
  %30 = vst [vmem:[#allocation2 + $0x10] sm:$0xff] %v28
  %v31 = vld [vmem:[%s5] ss:$2 sm:$0x3]
  %s32 = scalar_lea.vmem %s5, 1
  %v33 = vld [vmem:[%s32] ss:$2 sm:$0x3]
  %v34 = vld [vmem:[#allocation2] sm:$0xf]
  %v35 = vld [vmem:[#allocation2 + $0x8] sm:$0xf]
  %v36 = vld [vmem:[#allocation2 + $0x10] sm:$0xf]
  %v38 = vperm.slane %v31, 0
  %v39 = vperm.slane %v31, 1
  %40 = vrot.lane.b32.xlu0 %v38, 111
  %v41 = vpop.permute.xlu0 %40
  %42 = vrot.lane.b32.xlu0 %v39, 111
  %v43 = vpop.permute.xlu0 %42
  %vm44 = vcmask 908288
  %v45 = vsel %vm44, %v41, %v43
  %v49 = vmul.f32 %v34, %v41
  %v50 = vmul.f32 %v35, %v45
  %v51 = vmul.f32 %v36, %v43
  %55 = vrot.lane.b32.xlu0 %v49, 17
  %v56 = vpop.permute.xlu0 %55
  %57 = vrot.lane.b32.xlu0 %v50, 17
  %v58 = vpop.permute.xlu0 %57
  %59 = vrot.lane.b32.xlu0 %v51, 17
  %v60 = vpop.permute.xlu0 %59
  %vm61 = vcmask 138240
  %v62 = vsel %vm61, %v56, %v58
  %v63 = vsel %vm61, %v58, %v60
  %66 = vst [vmem:[#allocation3] sm:$0xf] %v62
  %67 = vst [vmem:[#allocation3 + $0x8] sm:$0xf] %v63
  %v68 = vld [vmem:[#allocation2] sm:$0xf0]
  %v69 = vld [vmem:[#allocation2 + $0x8] sm:$0xf0]
  %v70 = vld [vmem:[#allocation2 + $0x10] sm:$0xf0]
  %v71 = vmul.f32 %v68, %v41
  %v72 = vmul.f32 %v69, %v45
  %v73 = vmul.f32 %v70, %v43
  %v77 = vrot.slane %v71, 4
  %v78 = vrot.slane %v72, 4
  %v79 = vrot.slane %v73, 4
  %80 = vrot.lane.b32.xlu0 %v77, 17
  %v81 = vpop.permute.xlu0 %80
  %82 = vrot.lane.b32.xlu0 %v78, 17
  %v83 = vpop.permute.xlu0 %82
  %84 = vrot.lane.b32.xlu0 %v79, 17
  %v85 = vpop.permute.xlu0 %84
  %v86 = vsel %vm61, %v81, %v83
  %v87 = vsel %vm61, %v83, %v85
  %90 = vst [vmem:[#allocation3 + $0x10] sm:$0xf] %v86
  %91 = vst [vmem:[#allocation3 + $0x18] sm:$0xf] %v87
  %v92 = vld [vmem:[#allocation2] sm:$0xf]
  %v93 = vld [vmem:[#allocation2 + $0x8] sm:$0xf]
  %v94 = vld [vmem:[#allocation2 + $0x10] sm:$0xf]
  %v98 = vrot.slane %v92, 4
  %v99 = vrot.slane %v93, 4
  %v100 = vrot.slane %v94, 4
  %101 = vrot.lane.b32.xlu0 %v98, 16
  %v102 = vpop.permute.xlu0 %101
  %103 = vrot.lane.b32.xlu0 %v99, 16
  %v104 = vpop.permute.xlu0 %103
  %105 = vrot.lane.b32.xlu0 %v100, 16
  %v106 = vpop.permute.xlu0 %105
  %vm107 = vcmask 130048
  %v108 = vsel %vm107, %v102, %v104
  %v109 = vsel %vm107, %v104, %v106
  %112 = vst [vmem:[#allocation3] sm:$0xf0] %v108
  %113 = vst [vmem:[#allocation3 + $0x8] sm:$0xf0] %v109
  %v114 = vld [vmem:[#allocation2] sm:$0xf0]
  %v115 = vld [vmem:[#allocation2 + $0x8] sm:$0xf0]
  %v116 = vld [vmem:[#allocation2 + $0x10] sm:$0xf0]
  %120 = vrot.lane.b32.xlu0 %v114, 16
  %v121 = vpop.permute.xlu0 %120
  %122 = vrot.lane.b32.xlu0 %v115, 16
  %v123 = vpop.permute.xlu0 %122
  %124 = vrot.lane.b32.xlu0 %v116, 16
  %v125 = vpop.permute.xlu0 %124
  %v126 = vsel %vm107, %v121, %v123
  %v127 = vsel %vm107, %v123, %v125
  %130 = vst [vmem:[#allocation3 + $0x10] sm:$0xf0] %v126
  %131 = vst [vmem:[#allocation3 + $0x18] sm:$0xf0] %v127
  %v132 = vld [vmem:[#allocation2] sm:$0xf]
  %v133 = vld [vmem:[#allocation2 + $0x8] sm:$0xf]
  %v134 = vld [vmem:[#allocation2 + $0x10] sm:$0xf]
  %v136 = vperm.slane %v33, 0
  %v137 = vperm.slane %v33, 1
  %138 = vrot.lane.b32.xlu0 %v136, 113
  %v139 = vpop.permute.xlu0 %138
  %140 = vrot.lane.b32.xlu0 %v137, 113
  %v141 = vpop.permute.xlu0 %140
  %vm142 = vcmask 924672
  %v143 = vsel %vm142, %v139, %v141
  %v147 = vmul.f32 %v132, %v139
  %v148 = vmul.f32 %v133, %v143
  %v149 = vmul.f32 %v134, %v141
  %153 = vrot.lane.b32.xlu0 %v147, 15
  %v154 = vpop.permute.xlu0 %153
  %155 = vrot.lane.b32.xlu0 %v148, 15
  %v156 = vpop.permute.xlu0 %155
  %157 = vrot.lane.b32.xlu0 %v149, 15
  %v158 = vpop.permute.xlu0 %157
  %vm159 = vcmask 121856
  %v160 = vsel %vm159, %v154, %v156
  %v161 = vsel %vm159, %v156, %v158
  %164 = vst [vmem:[#allocation3 + $0x20] sm:$0xf] %v160
  %165 = vst [vmem:[#allocation3 + $0x28] sm:$0xf] %v161
  %v166 = vld [vmem:[#allocation2] sm:$0xf0]
  %v167 = vld [vmem:[#allocation2 + $0x8] sm:$0xf0]
  %v168 = vld [vmem:[#allocation2 + $0x10] sm:$0xf0]
  %v169 = vmul.f32 %v166, %v139
  %v170 = vmul.f32 %v167, %v143
  %v171 = vmul.f32 %v168, %v141
  %v175 = vrot.slane %v169, 4
  %v176 = vrot.slane %v170, 4
  %v177 = vrot.slane %v171, 4
  %178 = vrot.lane.b32.xlu0 %v175, 15
  %v179 = vpop.permute.xlu0 %178
  %180 = vrot.lane.b32.xlu0 %v176, 15
  %v181 = vpop.permute.xlu0 %180
  %182 = vrot.lane.b32.xlu0 %v177, 15
  %v183 = vpop.permute.xlu0 %182
  %v184 = vsel %vm159, %v179, %v181
  %v185 = vsel %vm159, %v181, %v183
  %188 = vst [vmem:[#allocation3 + $0x30] sm:$0xf] %v184
  %189 = vst [vmem:[#allocation3 + $0x38] sm:$0xf] %v185
  %v190 = vld [vmem:[#allocation2] sm:$0xf]
  %v191 = vld [vmem:[#allocation2 + $0x8] sm:$0xf]
  %v192 = vld [vmem:[#allocation2 + $0x10] sm:$0xf]
  %193 = vrot.lane.b32.xlu0 %v38, 127
  %v194 = vpop.permute.xlu0 %193
  %195 = vrot.lane.b32.xlu0 %v39, 127
  %v196 = vpop.permute.xlu0 %195
  %vm197 = vcmask 1039360
  %v198 = vsel %vm197, %v194, %v196
  %v202 = vmul.f32 %v190, %v194
  %v203 = vmul.f32 %v191, %v198
  %v204 = vmul.f32 %v192, %v196
  %v208 = vrot.slane %v202, 4
  %v209 = vrot.slane %v203, 4
  %v210 = vrot.slane %v204, 4
  %211 = vrot.lane.b32.xlu0 %v208, 1
  %v212 = vpop.permute.xlu0 %211
  %213 = vrot.lane.b32.xlu0 %v209, 1
  %v214 = vpop.permute.xlu0 %213
  %215 = vrot.lane.b32.xlu0 %v210, 1
  %v216 = vpop.permute.xlu0 %215
  %vm217 = vcmask 7168
  %v218 = vsel %vm217, %v212, %v214
  %v219 = vsel %vm217, %v214, %v216
  %222 = vst [vmem:[#allocation3 + $0x20] sm:$0xf0] %v218
  %223 = vst [vmem:[#allocation3 + $0x28] sm:$0xf0] %v219
  %v224 = vld [vmem:[#allocation2] sm:$0xf0]
  %v225 = vld [vmem:[#allocation2 + $0x8] sm:$0xf0]
  %v226 = vld [vmem:[#allocation2 + $0x10] sm:$0xf0]
  %v227 = vmul.f32 %v224, %v194
  %v228 = vmul.f32 %v225, %v198
  %v229 = vmul.f32 %v226, %v196
  %233 = vrot.lane.b32.xlu0 %v227, 1
  %v234 = vpop.permute.xlu0 %233
  %235 = vrot.lane.b32.xlu0 %v228, 1
  %v236 = vpop.permute.xlu0 %235
  %237 = vrot.lane.b32.xlu0 %v229, 1
  %v238 = vpop.permute.xlu0 %237
  %v239 = vsel %vm217, %v234, %v236
  %v240 = vsel %vm217, %v236, %v238
  %243 = vst [vmem:[#allocation3 + $0x30] sm:$0xf0] %v239
  %244 = vst [vmem:[#allocation3 + $0x38] sm:$0xf0] %v240
  %v245 = vld [vmem:[#allocation2 + $0x8] sm:$0xf]
  %v246 = vld [vmem:[#allocation2 + $0x10] sm:$0xf]
  %247 = vst [vmem:[#allocation3 + $0x40] sm:$0xf] %v245
  %248 = vst [vmem:[#allocation3 + $0x48] sm:$0xf] %v246
  %v249 = vld [vmem:[#allocation2 + $0x8] sm:$0xf0]
  %v250 = vld [vmem:[#allocation2 + $0x10] sm:$0xf0]
  %v253 = vrot.slane %v249, 4
  %v254 = vrot.slane %v250, 4
  %257 = vst [vmem:[#allocation3 + $0x50] sm:$0xf] %v253
  %258 = vst [vmem:[#allocation3 + $0x58] sm:$0xf] %v254
  %v259 = vld [vmem:[#allocation2 + $0x8] sm:$0xf]
  %v260 = vld [vmem:[#allocation2 + $0x10] sm:$0xf]
  %v261 = vld [vmem:[#allocation2 + $0x18] sm:$0xf]
  %262 = vrot.lane.b32.xlu0 %v136, 1
  %v263 = vpop.permute.xlu0 %262
  %264 = vrot.lane.b32.xlu0 %v137, 1
  %v265 = vpop.permute.xlu0 %264
  %v266 = vsel %vm217, %v263, %v265
  %v270 = vmul.f32 %v259, %v263
  %v271 = vmul.f32 %v260, %v266
  %v272 = vmul.f32 %v261, %v265
  %v276 = vrot.slane %v270, 4
  %v277 = vrot.slane %v271, 4
  %v278 = vrot.slane %v272, 4
  %279 = vrot.lane.b32.xlu0 %v276, 127
  %v280 = vpop.permute.xlu0 %279
  %281 = vrot.lane.b32.xlu0 %v277, 127
  %v282 = vpop.permute.xlu0 %281
  %283 = vrot.lane.b32.xlu0 %v278, 127
  %v284 = vpop.permute.xlu0 %283
  %v285 = vsel %vm197, %v280, %v282
  %v286 = vsel %vm197, %v282, %v284
  %289 = vst [vmem:[#allocation3 + $0x40] sm:$0xf0] %v285
  %290 = vst [vmem:[#allocation3 + $0x48] sm:$0xf0] %v286
  %v291 = vld [vmem:[#allocation2 + $0x8] sm:$0xf0]
  %v292 = vld [vmem:[#allocation2 + $0x10] sm:$0xf0]
  %v293 = vld [vmem:[#allocation2 + $0x18] sm:$0xf0]
  %v294 = vmul.f32 %v291, %v263
  %v295 = vmul.f32 %v292, %v266
  %v296 = vmul.f32 %v293, %v265
  %300 = vrot.lane.b32.xlu0 %v294, 127
  %v301 = vpop.permute.xlu0 %300
  %302 = vrot.lane.b32.xlu0 %v295, 127
  %v303 = vpop.permute.xlu0 %302
  %304 = vrot.lane.b32.xlu0 %v296, 127
  %v305 = vpop.permute.xlu0 %304
  %v306 = vsel %vm197, %v301, %v303
  %v307 = vsel %vm197, %v303, %v305
  %310 = vst [vmem:[#allocation3 + $0x50] sm:$0xf0] %v306
  %311 = vst [vmem:[#allocation3 + $0x58] sm:$0xf0] %v307
  %v312 = vld [vmem:[#allocation2 + $0x8] sm:$0xf]
  %v313 = vld [vmem:[#allocation2 + $0x10] sm:$0xf]
  %v314 = vld [vmem:[#allocation2 + $0x18] sm:$0xf]
  %315 = vrot.lane.b32.xlu0 %v38, 15
  %v316 = vpop.permute.xlu0 %315
  %317 = vrot.lane.b32.xlu0 %v39, 15
  %v318 = vpop.permute.xlu0 %317
  %v319 = vsel %vm159, %v316, %v318
  %v323 = vmul.f32 %v312, %v316
  %v324 = vmul.f32 %v313, %v319
  %v325 = vmul.f32 %v314, %v318
  %329 = vrot.lane.b32.xlu0 %v323, 113
  %v330 = vpop.permute.xlu0 %329
  %331 = vrot.lane.b32.xlu0 %v324, 113
  %v332 = vpop.permute.xlu0 %331
  %333 = vrot.lane.b32.xlu0 %v325, 113
  %v334 = vpop.permute.xlu0 %333
  %v335 = vsel %vm142, %v330, %v332
  %v336 = vsel %vm142, %v332, %v334
  %339 = vst [vmem:[#allocation3 + $0x60] sm:$0xf] %v335
  %340 = vst [vmem:[#allocation3 + $0x68] sm:$0xf] %v336
  %v341 = vld [vmem:[#allocation2 + $0x8] sm:$0xf0]
  %v342 = vld [vmem:[#allocation2 + $0x10] sm:$0xf0]
  %v343 = vld [vmem:[#allocation2 + $0x18] sm:$0xf0]
  %v344 = vmul.f32 %v341, %v316
  %v345 = vmul.f32 %v342, %v319
  %v346 = vmul.f32 %v343, %v318
  %v350 = vrot.slane %v344, 4
  %v351 = vrot.slane %v345, 4
  %v352 = vrot.slane %v346, 4
  %353 = vrot.lane.b32.xlu0 %v350, 113
  %v354 = vpop.permute.xlu0 %353
  %355 = vrot.lane.b32.xlu0 %v351, 113
  %v356 = vpop.permute.xlu0 %355
  %357 = vrot.lane.b32.xlu0 %v352, 113
  %v358 = vpop.permute.xlu0 %357
  %v359 = vsel %vm142, %v354, %v356
  %v360 = vsel %vm142, %v356, %v358
  %363 = vst [vmem:[#allocation3 + $0x70] sm:$0xf] %v359
  %364 = vst [vmem:[#allocation3 + $0x78] sm:$0xf] %v360
  %v365 = vld [vmem:[#allocation2 + $0x8] sm:$0xf]
  %v366 = vld [vmem:[#allocation2 + $0x10] sm:$0xf]
  %v367 = vld [vmem:[#allocation2 + $0x18] sm:$0xf]
  %v371 = vrot.slane %v365, 4
  %v372 = vrot.slane %v366, 4
  %v373 = vrot.slane %v367, 4
  %374 = vrot.lane.b32.xlu0 %v371, 112
  %v375 = vpop.permute.xlu0 %374
  %376 = vrot.lane.b32.xlu0 %v372, 112
  %v377 = vpop.permute.xlu0 %376
  %378 = vrot.lane.b32.xlu0 %v373, 112
  %v379 = vpop.permute.xlu0 %378
  %vm380 = vcmask 916480
  %v381 = vsel %vm380, %v375, %v377
  %v382 = vsel %vm380, %v377, %v379
  %385 = vst [vmem:[#allocation3 + $0x60] sm:$0xf0] %v381
  %386 = vst [vmem:[#allocation3 + $0x68] sm:$0xf0] %v382
  %v387 = vld [vmem:[#allocation2 + $0x8] sm:$0xf0]
  %v388 = vld [vmem:[#allocation2 + $0x10] sm:$0xf0]
  %v389 = vld [vmem:[#allocation2 + $0x18] sm:$0xf0]
  %393 = vrot.lane.b32.xlu0 %v387, 112
  %v394 = vpop.permute.xlu0 %393
  %395 = vrot.lane.b32.xlu0 %v388, 112
  %v396 = vpop.permute.xlu0 %395
  %397 = vrot.lane.b32.xlu0 %v389, 112
  %v398 = vpop.permute.xlu0 %397
  %v399 = vsel %vm380, %v394, %v396
  %v400 = vsel %vm380, %v396, %v398
  %403 = vst [vmem:[#allocation3 + $0x70] sm:$0xf0] %v399
  %404 = vst [vmem:[#allocation3 + $0x78] sm:$0xf0] %v400
  %v405 = vld [vmem:[#allocation2 + $0x8] sm:$0xf]
  %v406 = vld [vmem:[#allocation2 + $0x10] sm:$0xf]
  %v407 = vld [vmem:[#allocation2 + $0x18] sm:$0xf]
  %408 = vrot.lane.b32.xlu0 %v136, 17
  %v409 = vpop.permute.xlu0 %408
  %410 = vrot.lane.b32.xlu0 %v137, 17
  %v411 = vpop.permute.xlu0 %410
  %v412 = vsel %vm61, %v409, %v411
  %v416 = vmul.f32 %v405, %v409
  %v417 = vmul.f32 %v406, %v412
  %v418 = vmul.f32 %v407, %v411
  %422 = vrot.lane.b32.xlu0 %v416, 111
  %v423 = vpop.permute.xlu0 %422
  %424 = vrot.lane.b32.xlu0 %v417, 111
  %v425 = vpop.permute.xlu0 %424
  %426 = vrot.lane.b32.xlu0 %v418, 111
  %v427 = vpop.permute.xlu0 %426
  %v428 = vsel %vm44, %v423, %v425
  %v429 = vsel %vm44, %v425, %v427
  %432 = vst [vmem:[#allocation3 + $0x80] sm:$0xf] %v428
  %433 = vst [vmem:[#allocation3 + $0x88] sm:$0xf] %v429
  %v434 = vld [vmem:[#allocation2 + $0x8] sm:$0xf0]
  %v435 = vld [vmem:[#allocation2 + $0x10] sm:$0xf0]
  %v436 = vld [vmem:[#allocation2 + $0x18] sm:$0xf0]
  %v437 = vmul.f32 %v434, %v409
  %v438 = vmul.f32 %v435, %v412
  %v439 = vmul.f32 %v436, %v411
  %v443 = vrot.slane %v437, 4
  %v444 = vrot.slane %v438, 4
  %v445 = vrot.slane %v439, 4
  %446 = vrot.lane.b32.xlu0 %v443, 111
  %v447 = vpop.permute.xlu0 %446
  %448 = vrot.lane.b32.xlu0 %v444, 111
  %v449 = vpop.permute.xlu0 %448
  %450 = vrot.lane.b32.xlu0 %v445, 111
  %v451 = vpop.permute.xlu0 %450
  %v452 = vsel %vm44, %v447, %v449
  %v453 = vsel %vm44, %v449, %v451
  %456 = vst [vmem:[#allocation3 + $0x90] sm:$0xf] %v452
  %457 = vst [vmem:[#allocation3 + $0x98] sm:$0xf] %v453
  %v458 = vld [vmem:[%s1] sm:$0xff]
  %v459 = vld [vmem:[%s1 + $0x8] sm:$0xff]
  %v460 = vld [vmem:[%s1 + $0x10] sm:$0xff]
  %v461 = vld [vmem:[%s1 + $0x18] sm:$0xff]
  %v462 = vld [vmem:[#allocation3] sm:$0xff]
  %v463 = vld [vmem:[#allocation3 + $0x8] sm:$0xff]
  %v464 = vld [vmem:[#allocation3 + $0x10] sm:$0xff]
  %v465 = vld [vmem:[#allocation3 + $0x18] sm:$0xff]
  %v466 = vld [vmem:[#allocation3 + $0x20] sm:$0xff]
  %v467 = vld [vmem:[#allocation3 + $0x28] sm:$0xff]
  %v468 = vld [vmem:[#allocation3 + $0x30] sm:$0xff]
  %v469 = vld [vmem:[#allocation3 + $0x38] sm:$0xff]
  %v470 = vld [vmem:[#allocation3 + $0x40] sm:$0xff]
  %v471 = vld [vmem:[#allocation3 + $0x48] sm:$0xff]
  %v472 = vld [vmem:[#allocation3 + $0x50] sm:$0xff]
  %v473 = vld [vmem:[#allocation3 + $0x58] sm:$0xff]
  %v474 = vld [vmem:[#allocation3 + $0x60] sm:$0xff]
  %v475 = vld [vmem:[#allocation3 + $0x68] sm:$0xff]
  %v476 = vld [vmem:[#allocation3 + $0x70] sm:$0xff]
  %v477 = vld [vmem:[#allocation3 + $0x78] sm:$0xff]
  %v478 = vld [vmem:[#allocation3 + $0x80] sm:$0xf]
  %v479 = vld [vmem:[#allocation3 + $0x88] sm:$0xf]
  %v480 = vld [vmem:[#allocation3 + $0x90] sm:$0xf]
  %v481 = vld [vmem:[#allocation3 + $0x98] sm:$0xf]
  %v482 = vld [vmem:[%s2] sm:$0xff]
  %v483 = vld [vmem:[%s2 + $0x8] sm:$0xff]
  %v484 = vld [vmem:[%s2 + $0x10] sm:$0xff]
  %v485 = vld [vmem:[%s2 + $0x18] sm:$0xff]
  %487 = vset.pattern.permute.xlu0 0
  %488 = vperm.xlu0 %487, %v482
  %v489 = vpop.permute.xlu0 %488
  %492 = vset.pattern.permute.xlu0 0
  %493 = vperm.xlu0 %492, %v483
  %v494 = vpop.permute.xlu0 %493
  %497 = vset.pattern.permute.xlu0 0
  %498 = vperm.xlu0 %497, %v484
  %v499 = vpop.permute.xlu0 %498
  %502 = vset.pattern.permute.xlu0 0
  %503 = vperm.xlu0 %502, %v485
  %v504 = vpop.permute.xlu0 %503
  %vm506 = vcmask 293888
  %v508 = vsel %vm506, %v458, 0
  %v511 = vsel %vm506, %v459, 0
  %v514 = vsel %vm506, %v460, 0
  %v517 = vsel %vm506, %v461, 0
  %vm519 = vcmask 1043456
  %v521 = vsel %vm519, %v478, 0
  %v524 = vsel %vm519, %v479, 0
  %v527 = vsel %vm519, %v480, 0
  %v530 = vsel %vm519, %v481, 0
  %532 = vmatpush.msra.mxu0 0.0
  %533 = vmatpush.msra.mxu0 0.0
  %534 = vmatpush.msra.mxu0 0.0
  %535 = vmatpush.msra.mxu0 0.0
  %536 = vmatpush.msra.mxu0 0.0
  %537 = vmatpush.msra.mxu0 0.0
  %538 = vmatpush.msra.mxu0 0.0
  %539 = vmatpush.msra.mxu0 0.0
  %540 = vmatpush.msra.mxu0 0.0
  %541 = vmatpush.msra.mxu0 0.0
  %542 = vmatpush.msra.mxu0 0.0
  %543 = vmatpush.msra.mxu0 %v521
  %544 = vmatpush.msra.mxu0 %v474
  %545 = vmatpush.msra.mxu0 %v470
  %546 = vmatpush.msra.mxu0 %v466
  %547 = vmatpush.msra.mxu0 %v462
  %548 = vmatmul.f32.gmra.mxu0 %v508
  %v549 = vpop.f32.mrf.mxu0
  %v550 = vadd.f32 %v489, %v549
  %551 = vmatmul.f32.gmra.mxu0 %v511
  %v552 = vpop.f32.mrf.mxu0
  %v553 = vadd.f32 %v494, %v552
  %554 = vmatmul.f32.gmra.mxu0 %v514
  %v555 = vpop.f32.mrf.mxu0
  %v556 = vadd.f32 %v499, %v555
  %557 = vmatmul.f32.gmra.mxu0 %v517
  %v558 = vpop.f32.mrf.mxu0
  %v559 = vadd.f32 %v504, %v558
  %560 = vdwg.mxu0
  %561 = vmatpush.msra.mxu0 0.0
  %562 = vmatpush.msra.mxu0 0.0
  %563 = vmatpush.msra.mxu0 0.0
  %564 = vmatpush.msra.mxu0 0.0
  %565 = vmatpush.msra.mxu0 0.0
  %566 = vmatpush.msra.mxu0 0.0
  %567 = vmatpush.msra.mxu0 0.0
  %568 = vmatpush.msra.mxu0 0.0
  %569 = vmatpush.msra.mxu0 0.0
  %570 = vmatpush.msra.mxu0 0.0
  %571 = vmatpush.msra.mxu0 0.0
  %572 = vmatpush.msra.mxu0 %v524
  %573 = vmatpush.msra.mxu0 %v475
  %574 = vmatpush.msra.mxu0 %v471
  %575 = vmatpush.msra.mxu0 %v467
  %576 = vmatpush.msra.mxu0 %v463
  %577 = vmatmul.f32.gmra.mxu0 %v508
  %v578 = vpop.f32.mrf.mxu0
  %v579 = vadd.f32 %v489, %v578
  %580 = vmatmul.f32.gmra.mxu0 %v511
  %v581 = vpop.f32.mrf.mxu0
  %v582 = vadd.f32 %v494, %v581
  %583 = vmatmul.f32.gmra.mxu0 %v514
  %v584 = vpop.f32.mrf.mxu0
  %v585 = vadd.f32 %v499, %v584
  %586 = vmatmul.f32.gmra.mxu0 %v517
  %v587 = vpop.f32.mrf.mxu0
  %v588 = vadd.f32 %v504, %v587
  %589 = vdwg.mxu0
  %590 = vmatpush.msra.mxu0 0.0
  %591 = vmatpush.msra.mxu0 0.0
  %592 = vmatpush.msra.mxu0 0.0
  %593 = vmatpush.msra.mxu0 0.0
  %594 = vmatpush.msra.mxu0 0.0
  %595 = vmatpush.msra.mxu0 0.0
  %596 = vmatpush.msra.mxu0 0.0
  %597 = vmatpush.msra.mxu0 0.0
  %598 = vmatpush.msra.mxu0 0.0
  %599 = vmatpush.msra.mxu0 0.0
  %600 = vmatpush.msra.mxu0 0.0
  %601 = vmatpush.msra.mxu0 %v527
  %602 = vmatpush.msra.mxu0 %v476
  %603 = vmatpush.msra.mxu0 %v472
  %604 = vmatpush.msra.mxu0 %v468
  %605 = vmatpush.msra.mxu0 %v464
  %606 = vmatmul.f32.gmra.mxu0 %v508
  %v607 = vpop.f32.mrf.mxu0
  %v608 = vadd.f32 %v489, %v607
  %609 = vmatmul.f32.gmra.mxu0 %v511
  %v610 = vpop.f32.mrf.mxu0
  %v611 = vadd.f32 %v494, %v610
  %612 = vmatmul.f32.gmra.mxu0 %v514
  %v613 = vpop.f32.mrf.mxu0
  %v614 = vadd.f32 %v499, %v613
  %615 = vmatmul.f32.gmra.mxu0 %v517
  %v616 = vpop.f32.mrf.mxu0
  %v617 = vadd.f32 %v504, %v616
  %618 = vdwg.mxu0
  %619 = vmatpush.msra.mxu0 0.0
  %620 = vmatpush.msra.mxu0 0.0
  %621 = vmatpush.msra.mxu0 0.0
  %622 = vmatpush.msra.mxu0 0.0
  %623 = vmatpush.msra.mxu0 0.0
  %624 = vmatpush.msra.mxu0 0.0
  %625 = vmatpush.msra.mxu0 0.0
  %626 = vmatpush.msra.mxu0 0.0
  %627 = vmatpush.msra.mxu0 0.0
  %628 = vmatpush.msra.mxu0 0.0
  %629 = vmatpush.msra.mxu0 0.0
  %630 = vmatpush.msra.mxu0 %v530
  %631 = vmatpush.msra.mxu0 %v477
  %632 = vmatpush.msra.mxu0 %v473
  %633 = vmatpush.msra.mxu0 %v469
  %634 = vmatpush.msra.mxu0 %v465
  %635 = vmatmul.f32.gmra.mxu0 %v508
  %v636 = vpop.f32.mrf.mxu0
  %v637 = vadd.f32 %v489, %v636
  %638 = vmatmul.f32.gmra.mxu0 %v511
  %v639 = vpop.f32.mrf.mxu0
  %v640 = vadd.f32 %v494, %v639
  %641 = vmatmul.f32.gmra.mxu0 %v514
  %v642 = vpop.f32.mrf.mxu0
  %v643 = vadd.f32 %v499, %v642
  %644 = vmatmul.f32.gmra.mxu0 %v517
  %v645 = vpop.f32.mrf.mxu0
  %v646 = vadd.f32 %v504, %v645
  %647 = vdwg.mxu0
  %v648 = vmax.f32 %v550, 0.0
  %v649 = vmax.f32 %v579, 0.0
  %v650 = vmax.f32 %v608, 0.0
  %v651 = vmax.f32 %v637, 0.0
  %v652 = vmax.f32 %v553, 0.0
  %v653 = vmax.f32 %v582, 0.0
  %v654 = vmax.f32 %v611, 0.0
  %v655 = vmax.f32 %v640, 0.0
  %v656 = vmax.f32 %v556, 0.0
  %v657 = vmax.f32 %v585, 0.0
  %v658 = vmax.f32 %v614, 0.0
  %v659 = vmax.f32 %v643, 0.0
  %v660 = vmax.f32 %v559, 0.0
  %v661 = vmax.f32 %v588, 0.0
  %v662 = vmax.f32 %v617, 0.0
  %v663 = vmax.f32 %v646, 0.0
  %v664 = vld [vmem:[%s3] sm:$0xf]
  %v665 = vld [vmem:[%s4] sm:$0xf]
  %667 = vset.pattern.permute.xlu0 0
  %668 = vperm.xlu0 %667, %v665
  %v669 = vpop.permute.xlu0 %668
  %vm671 = vcmask 261120
  %v673 = vsel %vm671, %v664, 0
  %675 = vmatpush.msra.mxu0 0.0
  %676 = vmatpush.msra.mxu0 0.0
  %677 = vmatpush.msra.mxu0 0.0
  %678 = vmatpush.msra.mxu0 0.0
  %679 = vmatpush.msra.mxu0 0.0
  %680 = vmatpush.msra.mxu0 0.0
  %681 = vmatpush.msra.mxu0 0.0
  %682 = vmatpush.msra.mxu0 0.0
  %683 = vmatpush.msra.mxu0 0.0
  %684 = vmatpush.msra.mxu0 0.0
  %685 = vmatpush.msra.mxu0 0.0
  %686 = vmatpush.msra.mxu0 0.0
  %687 = vmatpush.msra.mxu0 %v660
  %688 = vmatpush.msra.mxu0 %v656
  %689 = vmatpush.msra.mxu0 %v652
  %690 = vmatpush.msra.mxu0 %v648
  %691 = vmatmul.f32.gmra.mxu0 %v673
  %v692 = vpop.f32.mrf.mxu0
  %v693 = vadd.f32 %v669, %v692
  %694 = vdwg.mxu0
  %695 = vmatpush.msra.mxu0 0.0
  %696 = vmatpush.msra.mxu0 0.0
  %697 = vmatpush.msra.mxu0 0.0
  %698 = vmatpush.msra.mxu0 0.0
  %699 = vmatpush.msra.mxu0 0.0
  %700 = vmatpush.msra.mxu0 0.0
  %701 = vmatpush.msra.mxu0 0.0
  %702 = vmatpush.msra.mxu0 0.0
  %703 = vmatpush.msra.mxu0 0.0
  %704 = vmatpush.msra.mxu0 0.0
  %705 = vmatpush.msra.mxu0 0.0
  %706 = vmatpush.msra.mxu0 0.0
  %707 = vmatpush.msra.mxu0 %v661
  %708 = vmatpush.msra.mxu0 %v657
  %709 = vmatpush.msra.mxu0 %v653
  %710 = vmatpush.msra.mxu0 %v649
  %711 = vmatmul.f32.gmra.mxu0 %v673
  %v712 = vpop.f32.mrf.mxu0
  %v713 = vadd.f32 %v669, %v712
  %714 = vdwg.mxu0
  %715 = vmatpush.msra.mxu0 0.0
  %716 = vmatpush.msra.mxu0 0.0
  %717 = vmatpush.msra.mxu0 0.0
  %718 = vmatpush.msra.mxu0 0.0
  %719 = vmatpush.msra.mxu0 0.0
  %720 = vmatpush.msra.mxu0 0.0
  %721 = vmatpush.msra.mxu0 0.0
  %722 = vmatpush.msra.mxu0 0.0
  %723 = vmatpush.msra.mxu0 0.0
  %724 = vmatpush.msra.mxu0 0.0
  %725 = vmatpush.msra.mxu0 0.0
  %726 = vmatpush.msra.mxu0 0.0
  %727 = vmatpush.msra.mxu0 %v662
  %728 = vmatpush.msra.mxu0 %v658
  %729 = vmatpush.msra.mxu0 %v654
  %730 = vmatpush.msra.mxu0 %v650
  %731 = vmatmul.f32.gmra.mxu0 %v673
  %v732 = vpop.f32.mrf.mxu0
  %v733 = vadd.f32 %v669, %v732
  %734 = vdwg.mxu0
  %735 = vmatpush.msra.mxu0 0.0
  %736 = vmatpush.msra.mxu0 0.0
  %737 = vmatpush.msra.mxu0 0.0
  %738 = vmatpush.msra.mxu0 0.0
  %739 = vmatpush.msra.mxu0 0.0
  %740 = vmatpush.msra.mxu0 0.0
  %741 = vmatpush.msra.mxu0 0.0
  %742 = vmatpush.msra.mxu0 0.0
  %743 = vmatpush.msra.mxu0 0.0
  %744 = vmatpush.msra.mxu0 0.0
  %745 = vmatpush.msra.mxu0 0.0
  %746 = vmatpush.msra.mxu0 0.0
  %747 = vmatpush.msra.mxu0 %v663
  %748 = vmatpush.msra.mxu0 %v659
  %749 = vmatpush.msra.mxu0 %v655
  %750 = vmatpush.msra.mxu0 %v651
  %751 = vmatmul.f32.gmra.mxu0 %v673
  %v752 = vpop.f32.mrf.mxu0
  %v753 = vadd.f32 %v669, %v752
  %754 = vdwg.mxu0
  %v755 = vld [vmem:[#allocation2 + $0x8] sm:$0xf]
  %v756 = vld [vmem:[#allocation2 + $0x10] sm:$0xf]
  %v757 = vadd.f32 %v693, %v755
  %v758 = vadd.f32 %v713, %v756
  %759 = vst [vmem:[%s6] sm:$0xf] %v757
  %760 = vst [vmem:[%s6 + $0x8] sm:$0xf] %v758
  %v761 = vld [vmem:[#allocation2 + $0x8] sm:$0xf0]
  %v762 = vld [vmem:[#allocation2 + $0x10] sm:$0xf0]
  %v765 = vrot.slane %v761, 4
  %v766 = vrot.slane %v762, 4
  %v769 = vadd.f32 %v733, %v765
  %v770 = vadd.f32 %v753, %v766
  %v773 = vrot.slane %v769, 4
  %v774 = vrot.slane %v770, 4
  %777 = vst [vmem:[%s6] sm:$0xf0] %v773
  %778 = vst [vmem:[%s6 + $0x8] sm:$0xf0] %v774
  // Predicated region
  $region26: #{resblock_pallas.1} parent=0 // pred_check
    _
  $region27: #{resblock_pallas.1} parent=0 // pred_check_branch
    %780 = sbr.rel (0) target = $region29
  $region28: #{resblock_pallas.1} parent=0 // pred_region
    _
  $region29: #{resblock_pallas.1} parent=0 // pred_fallthru
    _
  // Predicated region
  $region30: #{resblock_pallas.1} parent=0 // pred_check
    _
  $region31: #{resblock_pallas.1} parent=0 // pred_check_branch
    %782 = sbr.rel (0) target = $region33
  $region32: #{resblock_pallas.1} parent=0 // pred_region
    _
  $region33: #{resblock_pallas.1} parent=0 // pred_fallthru
    _

</llo_original>
